<compile_context>
chip_gen: v7x
topology: tpu7x:2x2x1
jax: 0.10.0
libtpu: 0.0.40
codegen_flags: <defaults>
</compile_context>

<pallas_src>
import jax
import jax.numpy as jnp
from jax.experimental import pallas as pl
from jax.experimental.pallas import tpu as pltpu

BN_EPS = 1e-5


def _round_up(x, m):
    return (x + m - 1) // m * m


def _choose_tile(total, align, max_tile):
    """Tile size (multiple of `align`, <= max_tile) and padded total."""
    t = min(_round_up(total, align), max_tile)
    t = max(align, (t // align) * align)
    return t, _round_up(total, t)


# ----------------------------- Pallas kernel ---------------------------------

def _conv_bn_relu_kernel(x_ref, w_ref, scale_ref, bias_ref, o_ref):
    """Fused 1x1-conv GEMM + folded-BN + ReLU for one (batch, C_out, S) tile.

    x_ref:     (1, C_in, TS) f32  activations, spatial on lanes (lane-dense).
    w_ref:     (TC, C_in)    f32  conv weights.
    scale_ref: (TC, 1)       f32  gamma * rsqrt(var + eps).
    bias_ref:  (TC, 1)       f32  beta - mean * scale.
    o_ref:     (1, TC, TS)   f32  output tile (the only large HBM write).
    """
    x = x_ref[0].astype(jnp.bfloat16)        # in-kernel cast, hidden under DMA
    w = w_ref[...].astype(jnp.bfloat16)
    acc = jnp.dot(w, x, preferred_element_type=jnp.float32)      # (TC, TS)
    # Epilogue: one multiply-add + max per element, stored directly.
    o_ref[0] = jnp.maximum(acc * scale_ref[...] + bias_ref[...], 0.0)


# ----------------------------- wrapper ----------------------------------------

def conv1x1_bn_relu(x_nchw, w, gamma, beta, *, eps=BN_EPS):
    """1x1 Conv2d(bias=False) + BatchNorm2d(batch stats) + ReLU.

    x_nchw: (N, C_in, H, W) f32
    w:      (C_out, C_in, 1, 1) f32 (PyTorch layout)
    gamma, beta: (C_out,) f32
    returns (N, C_out, H, W) f32
    """
    n, cin, h, w_sp = x_nchw.shape
    cout = w.shape[0]
    s = h * w_sp
    m = n * s

    x3 = x_nchw.reshape(n, cin, s).astype(jnp.float32)   # free: NCHW -> (N,C,HW)
    w2 = w.reshape(cout, cin).astype(jnp.float32)

    # ---- BN batch statistics via the Gram trick: only O(C_in) / O(C_in^2)
    # outputs, one cheap fused read of x, no big intermediate. Computed from the
    # same bf16-rounded operands the kernel feeds the MXU.
    xb = x3.astype(jnp.bfloat16).astype(jnp.float32)
    wb = w2.astype(jnp.bfloat16).astype(jnp.float32)
    colsum = jnp.sum(xb, axis=(0, 2))                      # (C_in,)
    gram = jnp.einsum('nis,njs->ij', xb, xb)               # (C_in, C_in)
    inv_m = 1.0 / float(m)
    mean = (wb @ colsum) * inv_m                           # (C_out,)
    ex2 = jnp.sum((wb @ gram) * wb, axis=1) * inv_m        # E[y^2] per channel
    var = jnp.maximum(ex2 - mean * mean, 0.0)              # biased batch variance
    scale = gamma.astype(jnp.float32) * jax.lax.rsqrt(var + eps)
    bias = beta.astype(jnp.float32) - mean * scale

    # ---- Tiling: spatial on lanes (multiple of 128), C_out on sublanes.
    ts, s_pad = _choose_tile(s, 128, 2048)
    tc, c_pad = _choose_tile(cout, 8, 512)
    n_ct = c_pad // tc
    # v7x megacore: ensure >=2 parallel grid steps whenever spatial can split
    # (no effect on single-TC v5e / v6e).
    if n * n_ct * (s_pad // ts) == 1 and ts >= 256:
        ts //= 2
    n_st = s_pad // ts

    x_p = x3 if s_pad == s else jnp.pad(x3, ((0, 0), (0, 0), (0, s_pad - s)))
    w_p = w2 if c_pad == cout else jnp.pad(w2, ((0, c_pad - cout), (0, 0)))
    scale_p = jnp.pad(scale, (0, c_pad - cout)).reshape(c_pad, 1)
    bias_p = jnp.pad(bias, (0, c_pad - cout)).reshape(c_pad, 1)

    # VMEM budget: double-buffered x tile + out tile (+ tiny params), headroom.
    step_bytes = 2 * 4 * (cin * ts + tc * ts + tc * cin + 2 * tc)
    vmem_limit = int(min(max(2 * step_bytes + (4 << 20), 16 << 20), 64 << 20))

    flops = 2 * n * c_pad * s_pad * cin
    bytes_acc = 4 * (n * cin * s_pad + n * c_pad * s_pad + c_pad * (cin + 2))

    out = pl.pallas_call(
        _conv_bn_relu_kernel,
        out_shape=jax.ShapeDtypeStruct((n, c_pad, s_pad), jnp.float32),
        grid=(n, n_ct, n_st),
        in_specs=[
            pl.BlockSpec((1, cin, ts), lambda b, j, k: (b, 0, k)),   # x tile
            pl.BlockSpec((tc, cin), lambda b, j, k: (j, 0)),          # weights
            pl.BlockSpec((tc, 1), lambda b, j, k: (j, 0)),            # BN scale
            pl.BlockSpec((tc, 1), lambda b, j, k: (j, 0)),            # BN bias
        ],
        out_specs=pl.BlockSpec((1, tc, ts), lambda b, j, k: (b, j, k)),
        compiler_params=pltpu.CompilerParams(
            dimension_semantics=("parallel", "parallel", "parallel"),
            vmem_limit_bytes=vmem_limit),
        cost_estimate=pl.CostEstimate(flops=flops, transcendentals=0,
                                      bytes_accessed=bytes_acc),
    )(x_p, w_p, scale_p, bias_p)

    # Free reshape back to NCHW (no transpose needed); slicing only if padded.
    out = out[:, :cout, :s].reshape(n, cout, h, w_sp)
    return out


# ----------------------------- reference & main --------------------------------

def _reference(x, w, gamma, beta, eps=BN_EPS):
    y = jax.lax.conv_general_dilated(
        x, w, (1, 1), "VALID", dimension_numbers=("NCHW", "OIHW", "NCHW"))
    mean = jnp.mean(y, axis=(0, 2, 3), keepdims=True)
    var = jnp.mean(jnp.square(y - mean), axis=(0, 2, 3), keepdims=True)
    yn = (y - mean) * jax.lax.rsqrt(var + eps)
    yn = yn * gamma.reshape(1, -1, 1, 1) + beta.reshape(1, -1, 1, 1)
    return jnp.maximum(yn, 0.0)


if __name__ == "__main__":
    key = jax.random.PRNGKey(0)
    kx, kw, kg, kb = jax.random.split(key, 4)

    n, cin, hh, ww, cout = 2, 4, 16, 16, 32          # small shapes per the module
    x = jax.random.normal(kx, (n, cin, hh, ww), jnp.float32)
    w = jax.random.normal(kw, (cout, cin, 1, 1), jnp.float32) * (1.0 / cin) ** 0.5
    gamma = 1.0 + 0.1 * jax.random.normal(kg, (cout,), jnp.float32)
    beta = 0.1 * jax.random.normal(kb, (cout,), jnp.float32)

    fwd = jax.jit(conv1x1_bn_relu)
    out = jax.block_until_ready(fwd(x, w, gamma, beta))

    assert out.shape == (n, cout, hh, ww), out.shape
    assert bool(jnp.all(jnp.isfinite(out)))
    ref = _reference(x, w, gamma, beta)
    max_err = float(jnp.max(jnp.abs(out - ref)))
    # bf16 matmul operands (f32 accumulate) vs f32 reference.
    assert max_err < 5e-2, f"max abs err {max_err}"
    print("KERNEL_OK")
</pallas_src>

<mosaic_0001>
module attributes {stable_mosaic.version = 11 : i64} {
  func.func @_conv_bn_relu_kernel(%arg0: i32, %arg1: i32, %arg2: i32, %arg3: memref<1x4x256xf32, #tpu.memory_space<vmem>>, %arg4: memref<32x4xf32, #tpu.memory_space<vmem>>, %arg5: memref<32x1xf32, #tpu.memory_space<vmem>>, %arg6: memref<32x1xf32, #tpu.memory_space<vmem>>, %arg7: memref<1x32x256xf32, #tpu.memory_space<vmem>>) attributes {dimension_semantics = [#tpu.dimension_semantics<parallel>, #tpu.dimension_semantics<parallel>, #tpu.dimension_semantics<parallel>], iteration_bounds = array<i64: 2, 1, 1>, scalar_prefetch = 0 : i64, scratch_operands = 0 : i64, tpu.core_type = #tpu.core_type<tc>, window_params = [{transform_indices = @transform_0, window_bounds = array<i64: 1, 4, 256>}, {transform_indices = @transform_1, window_bounds = array<i64: 32, 4>}, {transform_indices = @transform_2, window_bounds = array<i64: 32, 1>}, {transform_indices = @transform_3, window_bounds = array<i64: 32, 1>}, {transform_indices = @transform_4, window_bounds = array<i64: 1, 32, 256>}]} {
    %c0 = arith.constant 0 : index
    %c0_0 = arith.constant 0 : index
    %c0_1 = arith.constant 0 : index
    %0 = vector.load %arg3[%c0, %c0_0, %c0_1] : memref<1x4x256xf32, #tpu.memory_space<vmem>>, vector<1x4x256xf32>
    %1 = vector.shape_cast %0 : vector<1x4x256xf32> to vector<4x256xf32>
    %2 = arith.truncf %1 : vector<4x256xf32> to vector<4x256xbf16>
    %c0_2 = arith.constant 0 : index
    %c0_3 = arith.constant 0 : index
    %3 = vector.load %arg4[%c0_2, %c0_3] : memref<32x4xf32, #tpu.memory_space<vmem>>, vector<32x4xf32>
    %4 = arith.truncf %3 : vector<32x4xf32> to vector<32x4xbf16>
    %cst = arith.constant dense<0.000000e+00> : vector<32x256xf32>
    %5 = tpu.matmul %4, %2, %cst {dimension_numbers = #tpu.dot_dimension_numbers<[1], [0], [0], [1], [0, 0, 1, 1], [], []>} : vector<32x4xbf16>, vector<4x256xbf16>, vector<32x256xf32> -> vector<32x256xf32>
    %c0_4 = arith.constant 0 : index
    %c0_5 = arith.constant 0 : index
    %6 = vector.load %arg5[%c0_4, %c0_5] : memref<32x1xf32, #tpu.memory_space<vmem>>, vector<32x1xf32>
    %7 = vector.broadcast %6 : vector<32x1xf32> to vector<32x256xf32>
    %8 = arith.mulf %5, %7 : vector<32x256xf32>
    %c0_6 = arith.constant 0 : index
    %c0_7 = arith.constant 0 : index
    %9 = vector.load %arg6[%c0_6, %c0_7] : memref<32x1xf32, #tpu.memory_space<vmem>>, vector<32x1xf32>
    %10 = vector.broadcast %9 : vector<32x1xf32> to vector<32x256xf32>
    %11 = arith.addf %8, %10 : vector<32x256xf32>
    %cst_8 = arith.constant 0.000000e+00 : f32
    %12 = vector.broadcast %cst_8 : f32 to vector<32x256xf32>
    %13 = arith.maximumf %11, %12 : vector<32x256xf32>
    %c0_9 = arith.constant 0 : index
    %c0_10 = arith.constant 0 : index
    %c0_11 = arith.constant 0 : index
    %14 = vector.load %arg7[%c0_9, %c0_10, %c0_11] : memref<1x32x256xf32, #tpu.memory_space<vmem>>, vector<1x32x256xf32>
    %15 = vector.shape_cast %14 : vector<1x32x256xf32> to vector<32x256xf32>
    %16 = vector.shape_cast %13 : vector<32x256xf32> to vector<1x32x256xf32>
    tpu.vector_store %arg7[%c0_9, %c0_10, %c0_11], %16 {strides = array<i32>} : memref<1x32x256xf32, #tpu.memory_space<vmem>>, vector<1x32x256xf32>,
    return
  }
  func.func @transform_0(%arg0: i32, %arg1: i32, %arg2: i32) -> (i32, i32, i32) {
    %c0_i32 = arith.constant 0 : i32
    %c0_i32_0 = arith.constant 0 : i32
    return %arg0, %c0_i32, %arg2 : i32, i32, i32
  }
  func.func @transform_1(%arg0: i32, %arg1: i32, %arg2: i32) -> (i32, i32) {
    %c0_i32 = arith.constant 0 : i32
    %c0_i32_0 = arith.constant 0 : i32
    return %arg1, %c0_i32 : i32, i32
  }
  func.func @transform_2(%arg0: i32, %arg1: i32, %arg2: i32) -> (i32, i32) {
    %c0_i32 = arith.constant 0 : i32
    %c0_i32_0 = arith.constant 0 : i32
    return %arg1, %c0_i32 : i32, i32
  }
  func.func @transform_3(%arg0: i32, %arg1: i32, %arg2: i32) -> (i32, i32) {
    %c0_i32 = arith.constant 0 : i32
    %c0_i32_0 = arith.constant 0 : i32
    return %arg1, %c0_i32 : i32, i32
  }
  func.func @transform_4(%arg0: i32, %arg1: i32, %arg2: i32) -> (i32, i32, i32) {
    %c0_i32 = arith.constant 0 : i32
    return %arg0, %arg1, %arg2 : i32, i32, i32
  }
}

</mosaic_0001>

<llo_original>
// kernel: conv1x1_bn_relu.1
$region0: #{conv1x1_bn_relu.1}
  #allocation0 [shape = 'u32[]', space=smem, size = 0x4, offset = 0x4, fixed_abs, tag = 'smem constant byte address 0x4 - core index']
  #allocation1 [shape = 'u32[144,128]{1,0:T(1,128)}', space=vmem, size = 0x12000, scoped, tag = 'internal scratch']
  %s0 = inlined_call_operand.vmem [shape: f32[2,4,256], index: 0, kind: input, shape index: {}]
  %s1 = inlined_call_operand.vmem [shape: f32[32,4], index: 1, kind: input, shape index: {}]
  %s2 = inlined_call_operand.vmem [shape: f32[32,1], index: 2, kind: input, shape index: {}]
  %s3 = inlined_call_operand.vmem [shape: f32[32,1], index: 3, kind: input, shape index: {}]
  %s4 = inlined_call_operand.vmem [shape: f32[2,32,256], index: 4, kind: output, shape index: {}]
  %s5 = sld [smem:[#allocation0]]
  $region49: #{conv1x1_bn_relu.1} parent=0
    _
  %s7 = ssub.s32 1, %s5
  %s8 = scalar_select 0, %s7, %s5
  loop: start=0, step=1, limit=4
  $region2: #{conv1x1_bn_relu.1} parent=0 // loop_pre_header
    _
  $region3: #{conv1x1_bn_relu.1} parent=0 // loop_header
    %s10 = sphi 0, %s14
    %p11 = scmp.ge.s32.totalorder %s10, 4
    %s17 = sphi 0, %s36
    %s18 = sphi 0, %s32
    %s19 = sphi 0, %s28
    %s20 = sphi 0, %s17
    %s21 = sphi 0, %s18
    %s22 = sphi 0, %s19
    %s23 = sphi 0, %s20
    %s24 = sphi 0, %s21
    %s25 = sphi 0, %s22
    %s41 = sphi 0, %s43
    %s44 = sphi 0, %s41
    %s45 = sphi 0, %s44
    %s61 = sphi 0, %s45
    %s67 = sphi 0, %s69
    %s70 = sphi 0, %s67
    %s71 = sphi 0, %s70
    %s87 = sphi 0, %s71
    %s93 = sphi 0, %s95
    %s96 = sphi 0, %s93
    %s97 = sphi 0, %s96
    %s113 = sphi 0, %s97
    %s119 = sphi 0, %s121
    %s122 = sphi 0, %s119
    %s123 = sphi 0, %s122
    %s139 = sphi 0, %s123
    %s149 = sphi 0, %s151
    %s152 = sphi 0, %s149
    %s153 = sphi 0, %s152
    %s169 = sphi 0, %s153
  $region4: #{conv1x1_bn_relu.1} parent=0 // loop_header_branch
    %13 = sbr.rel (%p11) target = $region8
  $region5: #{conv1x1_bn_relu.1} parent=0 // loop_body
    %s15 = ssub.s32 %s10, 1
    %s16 = ssub.s32 %s10, 2
    %s26 = sadd.s32 1, %s19
    %p27 = scmp.ge.s32.totalorder %s26, 1
    %s28 = scalar_select %p27, 0, %s26
    %s29 = sadd.s32 1, %s18
    %s30 = scalar_select %p27, %s29, %s18
    %p31 = scmp.ge.s32.totalorder %s30, 1
    %s32 = scalar_select %p31, 0, %s30
    %s33 = sadd.s32 1, %s17
    %s34 = scalar_select %p31, %s33, %s17
    %p35 = scmp.ge.s32.totalorder %s34, 2
    %s36 = scalar_select %p35, 0, %s34
    %s37 = ssub.s32 %s17, %s36
    %s38 = ssub.s32 %s19, %s28
    %s39 = sor.u32 %s37, %s38
    %p40 = scmp.eq.s32.totalorder %s39, 0
    %s42 = sadd.s32 %s41, 1
    %s43 = scalar_select %p40, %s41, %s42
    %p46 = pneg %p40
    %p47 = scmp.eq.s32.totalorder %s10, 1
    %p48 = por %p46, %p47
    %p49 = scmp.ne.s32.totalorder %s41, %s44
    %p50 = scmp.eq.s32.totalorder %s10, 0
    %p51 = por %p49, %p50
    %p52 = scmp.ne.s32.totalorder %s41, %s44
    %p53 = scmp.eq.s32.totalorder %s15, 1
    %p54 = por %p52, %p53
    %p55 = scmp.ne.s32.totalorder %s44, %s45
    %p56 = scmp.eq.s32.totalorder %s15, 0
    %p57 = por %p55, %p56
    %p58 = scmp.ne.s32.totalorder %s44, %s45
    %p59 = scmp.eq.s32.totalorder %s16, 1
    %p60 = por %p58, %p59
    %p62 = scmp.ne.s32.totalorder %s45, %s61
    %p63 = scmp.eq.s32.totalorder %s16, 0
    %p64 = por %p62, %p63
    %s65 = ssub.s32 %s18, %s32
    %p66 = scmp.eq.s32.totalorder %s65, 0
    %s68 = sadd.s32 %s67, 1
    %s69 = scalar_select %p66, %s67, %s68
    %p72 = pneg %p66
    %p73 = scmp.eq.s32.totalorder %s10, 1
    %p74 = por %p72, %p73
    %p75 = scmp.ne.s32.totalorder %s67, %s70
    %p76 = scmp.eq.s32.totalorder %s10, 0
    %p77 = por %p75, %p76
    %p78 = scmp.ne.s32.totalorder %s67, %s70
    %p79 = scmp.eq.s32.totalorder %s15, 1
    %p80 = por %p78, %p79
    %p81 = scmp.ne.s32.totalorder %s70, %s71
    %p82 = scmp.eq.s32.totalorder %s15, 0
    %p83 = por %p81, %p82
    %p84 = scmp.ne.s32.totalorder %s70, %s71
    %p85 = scmp.eq.s32.totalorder %s16, 1
    %p86 = por %p84, %p85
    %p88 = scmp.ne.s32.totalorder %s71, %s87
    %p89 = scmp.eq.s32.totalorder %s16, 0
    %p90 = por %p88, %p89
    %s91 = ssub.s32 %s18, %s32
    %p92 = scmp.eq.s32.totalorder %s91, 0
    %s94 = sadd.s32 %s93, 1
    %s95 = scalar_select %p92, %s93, %s94
    %p98 = pneg %p92
    %p99 = scmp.eq.s32.totalorder %s10, 1
    %p100 = por %p98, %p99
    %p101 = scmp.ne.s32.totalorder %s93, %s96
    %p102 = scmp.eq.s32.totalorder %s10, 0
    %p103 = por %p101, %p102
    %p104 = scmp.ne.s32.totalorder %s93, %s96
    %p105 = scmp.eq.s32.totalorder %s15, 1
    %p106 = por %p104, %p105
    %p107 = scmp.ne.s32.totalorder %s96, %s97
    %p108 = scmp.eq.s32.totalorder %s15, 0
    %p109 = por %p107, %p108
    %p110 = scmp.ne.s32.totalorder %s96, %s97
    %p111 = scmp.eq.s32.totalorder %s16, 1
    %p112 = por %p110, %p111
    %p114 = scmp.ne.s32.totalorder %s97, %s113
    %p115 = scmp.eq.s32.totalorder %s16, 0
    %p116 = por %p114, %p115
    %s117 = ssub.s32 %s18, %s32
    %p118 = scmp.eq.s32.totalorder %s117, 0
    %s120 = sadd.s32 %s119, 1
    %s121 = scalar_select %p118, %s119, %s120
    %p124 = pneg %p118
    %p125 = scmp.eq.s32.totalorder %s10, 1
    %p126 = por %p124, %p125
    %p127 = scmp.ne.s32.totalorder %s119, %s122
    %p128 = scmp.eq.s32.totalorder %s10, 0
    %p129 = por %p127, %p128
    %p130 = scmp.ne.s32.totalorder %s119, %s122
    %p131 = scmp.eq.s32.totalorder %s15, 1
    %p132 = por %p130, %p131
    %p133 = scmp.ne.s32.totalorder %s122, %s123
    %p134 = scmp.eq.s32.totalorder %s15, 0
    %p135 = por %p133, %p134
    %p136 = scmp.ne.s32.totalorder %s122, %s123
    %p137 = scmp.eq.s32.totalorder %s16, 1
    %p138 = por %p136, %p137
    %p140 = scmp.ne.s32.totalorder %s123, %s139
    %p141 = scmp.eq.s32.totalorder %s16, 0
    %p142 = por %p140, %p141
    %s143 = ssub.s32 %s17, %s36
    %s144 = ssub.s32 %s18, %s32
    %s145 = sor.u32 %s143, %s144
    %s146 = ssub.s32 %s19, %s28
    %s147 = sor.u32 %s145, %s146
    %p148 = scmp.eq.s32.totalorder %s147, 0
    %s150 = sadd.s32 %s149, 1
    %s151 = scalar_select %p148, %s149, %s150
    %p154 = pneg %p148
    %p155 = scmp.eq.s32.totalorder %s10, 1
    %p156 = por %p154, %p155
    %p157 = scmp.ne.s32.totalorder %s149, %s152
    %p158 = scmp.eq.s32.totalorder %s10, 0
    %p159 = por %p157, %p158
    %p160 = scmp.ne.s32.totalorder %s149, %s152
    %p161 = scmp.eq.s32.totalorder %s15, 1
    %p162 = por %p160, %p161
    %p163 = scmp.ne.s32.totalorder %s152, %s153
    %p164 = scmp.eq.s32.totalorder %s15, 0
    %p165 = por %p163, %p164
    %p166 = scmp.ne.s32.totalorder %s152, %s153
    %p167 = scmp.eq.s32.totalorder %s16, 1
    %p168 = por %p166, %p167
    %p170 = scmp.ne.s32.totalorder %s153, %s169
    %p171 = scmp.eq.s32.totalorder %s16, 0
    %p172 = por %p170, %p171
    %p173 = scmp.le.s32.totalorder 1, %s10
    %p174 = scmp.lt.s32.totalorder %s10, 3
    %p175 = pnand %p173, %p174
    %p176 = pneg %p175
    // Predicated region
    $region9: #{conv1x1_bn_relu.1} parent=5 // pred_check
      _
    $region10: #{conv1x1_bn_relu.1} parent=5 // pred_check_branch
      %178 = sbr.rel (%p175) target = $region12
    $region11: #{conv1x1_bn_relu.1} parent=5 // pred_region
      %s179 = ssub.s32 %s10, 1
      // Predicated region
      $region13: #{conv1x1_bn_relu.1} parent=11 // pred_check
        %p180 = pneg %p83
      $region14: #{conv1x1_bn_relu.1} parent=11 // pred_check_branch
        %182 = sbr.rel (%p180) target = $region16
      $region15: #{conv1x1_bn_relu.1} parent=11 // pred_region
        %s183 = smul.u32 4, %s21
        %p184 = scmp.lt.s32.totalorder %s183, 3
        %s185 = scalar_select %p184, %s183, 3
        %s186 = smul.addr %s185, 8
        %s187 = scalar_lea.vmem %s1, %s186
        %s188 = smul.u32 4, %s21
      $region16: #{conv1x1_bn_relu.1} parent=11 // pred_fallthru
        _
      // Predicated region
      $region17: #{conv1x1_bn_relu.1} parent=11 // pred_check
        %p189 = pneg %p109
      $region18: #{conv1x1_bn_relu.1} parent=11 // pred_check_branch
        %191 = sbr.rel (%p189) target = $region20
      $region19: #{conv1x1_bn_relu.1} parent=11 // pred_region
        %s192 = smul.u32 4, %s21
        %p193 = scmp.lt.s32.totalorder %s192, 3
        %s194 = scalar_select %p193, %s192, 3
        %s195 = smul.addr %s194, 8
        %s196 = scalar_lea.vmem %s2, %s195
        %s197 = smul.u32 4, %s21
      $region20: #{conv1x1_bn_relu.1} parent=11 // pred_fallthru
        _
      // Predicated region
      $region21: #{conv1x1_bn_relu.1} parent=11 // pred_check
        %p198 = pneg %p135
      $region22: #{conv1x1_bn_relu.1} parent=11 // pred_check_branch
        %200 = sbr.rel (%p198) target = $region24
      $region23: #{conv1x1_bn_relu.1} parent=11 // pred_region
        %s201 = smul.u32 4, %s21
        %p202 = scmp.lt.s32.totalorder %s201, 3
        %s203 = scalar_select %p202, %s201, 3
        %s204 = smul.addr %s203, 8
        %s205 = scalar_lea.vmem %s3, %s204
        %s206 = smul.u32 4, %s21
      $region24: #{conv1x1_bn_relu.1} parent=11 // pred_fallthru
        _
    $region12: #{conv1x1_bn_relu.1} parent=5 // pred_fallthru
      _
    %p207 = scmp.lt.s32.totalorder %s10, 2
    // Predicated region
    $region25: #{conv1x1_bn_relu.1} parent=5 // pred_check
      %p208 = pneg %p207
    $region26: #{conv1x1_bn_relu.1} parent=5 // pred_check_branch
      %210 = sbr.rel (%p208) target = $region28
    $region27: #{conv1x1_bn_relu.1} parent=5 // pred_region
      // Predicated region
      $region29: #{conv1x1_bn_relu.1} parent=27 // pred_check
        %p211 = pneg %p51
      $region30: #{conv1x1_bn_relu.1} parent=27 // pred_check_branch
        %213 = sbr.rel (%p211) target = $region32
      $region31: #{conv1x1_bn_relu.1} parent=27 // pred_region
        %s214 = smul.u32 2, %s19
        %p215 = scmp.lt.s32.totalorder %s17, 1
        %s216 = scalar_select %p215, %s17, 1
        %p217 = scmp.lt.s32.totalorder %s214, 1
        %s218 = scalar_select %p217, %s214, 1
        %s219 = smul.addr %s216, 2
        %s220 = sadd.s32 %s218, %s219
        %s221 = smul.addr %s220, 4
        %s222 = scalar_lea.vmem %s0, %s221
        %s223 = smul.u32 2, %s19
      $region32: #{conv1x1_bn_relu.1} parent=27 // pred_fallthru
        _
    $region28: #{conv1x1_bn_relu.1} parent=5 // pred_fallthru
      _
    %p224 = scmp.le.s32.totalorder 1, %s10
    %p225 = scmp.lt.s32.totalorder %s10, 3
    %p226 = pnand %p224, %p225
    %p227 = pneg %p226
    // Predicated region
    $region33: #{conv1x1_bn_relu.1} parent=5 // pred_check
      _
    $region34: #{conv1x1_bn_relu.1} parent=5 // pred_check_branch
      %229 = sbr.rel (%p226) target = $region36
    $region35: #{conv1x1_bn_relu.1} parent=5 // pred_region
      %s230 = ssub.s32 %s10, 1
      %s231 = smul.u32 2, %s22
      %p232 = scmp.lt.s32.totalorder %s20, 1
      %s233 = scalar_select %p232, %s20, 1
      %p234 = scmp.lt.s32.totalorder %s231, 1
      %s235 = scalar_select %p234, %s231, 1
      %s236 = smul.addr %s233, 2
      %s237 = sadd.s32 %s235, %s236
      %s238 = smul.addr %s237, 4
      %s239 = scalar_lea.vmem %s0, %s238
      %p240 = pneg %p57
      %p241 = pneg %p54
      %s242 = smul.u32 4, %s21
      %p243 = scmp.lt.s32.totalorder %s242, 3
      %s244 = scalar_select %p243, %s242, 3
      %s245 = smul.addr %s244, 8
      %s246 = scalar_lea.vmem %s1, %s245
      %p247 = pneg %p83
      %p248 = pneg %p80
      %s249 = smul.u32 4, %s21
      %p250 = scmp.lt.s32.totalorder %s249, 3
      %s251 = scalar_select %p250, %s249, 3
      %s252 = smul.addr %s251, 8
      %s253 = scalar_lea.vmem %s2, %s252
      %p254 = pneg %p109
      %p255 = pneg %p106
      %s256 = smul.u32 4, %s21
      %p257 = scmp.lt.s32.totalorder %s256, 3
      %s258 = scalar_select %p257, %s256, 3
      %s259 = smul.addr %s258, 8
      %s260 = scalar_lea.vmem %s3, %s259
      %p261 = pneg %p135
      %p262 = pneg %p132
      %p263 = pneg %p165
      %p264 = pneg %p162
      %s265 = smul.u32 4, %s21
      %s266 = smul.u32 2, %s22
      %p267 = scmp.lt.s32.totalorder %s20, 1
      %s268 = scalar_select %p267, %s20, 1
      %p269 = scmp.lt.s32.totalorder %s265, 3
      %s270 = scalar_select %p269, %s265, 3
      %p271 = scmp.lt.s32.totalorder %s266, 1
      %s272 = scalar_select %p271, %s266, 1
      %s273 = smul.addr %s270, 2
      %s274 = sadd.s32 %s272, %s273
      %s275 = smul.addr %s268, 8
      %s276 = sadd.s32 %s274, %s275
      %s277 = smul.addr %s276, 8
      %s278 = scalar_lea.vmem %s4, %s277
      %s279 = smul.u32 2, %s22
      %p280 = scmp.lt.s32.totalorder %s20, 1
      %s281 = scalar_select %p280, %s20, 1
      %p282 = scmp.lt.s32.totalorder %s279, 1
      %s283 = scalar_select %p282, %s279, 1
      %s284 = smul.addr %s281, 2
      %s285 = sadd.s32 %s283, %s284
      %s286 = smul.addr %s285, 4
      %s287 = scalar_lea.vmem %s0, %s286
      %s288 = smul.u32 2, %s22
      %s289 = smul.u32 4, %s21
      %p290 = scmp.lt.s32.totalorder %s289, 3
      %s291 = scalar_select %p290, %s289, 3
      %s292 = smul.addr %s291, 8
      %s293 = scalar_lea.vmem %s1, %s292
      %s294 = smul.u32 4, %s21
      %s295 = smul.u32 4, %s21
      %p296 = scmp.lt.s32.totalorder %s295, 3
      %s297 = scalar_select %p296, %s295, 3
      %s298 = smul.addr %s297, 8
      %s299 = scalar_lea.vmem %s2, %s298
      %s300 = smul.u32 4, %s21
      %s301 = smul.u32 4, %s21
      %p302 = scmp.lt.s32.totalorder %s301, 3
      %s303 = scalar_select %p302, %s301, 3
      %s304 = smul.addr %s303, 8
      %s305 = scalar_lea.vmem %s3, %s304
      %s306 = smul.u32 4, %s21
      %s307 = smul.u32 4, %s21
      %s308 = smul.u32 2, %s22
      %p309 = scmp.lt.s32.totalorder %s20, 1
      %s310 = scalar_select %p309, %s20, 1
      %p311 = scmp.lt.s32.totalorder %s307, 3
      %s312 = scalar_select %p311, %s307, 3
      %p313 = scmp.lt.s32.totalorder %s308, 1
      %s314 = scalar_select %p313, %s308, 1
      %s315 = smul.addr %s312, 2
      %s316 = sadd.s32 %s314, %s315
      %s317 = smul.addr %s310, 8
      %s318 = sadd.s32 %s316, %s317
      %s319 = smul.addr %s318, 8
      %s320 = scalar_lea.vmem %s4, %s319
      %s321 = smul.u32 4, %s21
      %s322 = smul.u32 2, %s22
      %v324 = vld [vmem:[%s287] sm:$0xff]
      %v326 = vcombine.high %v324, %v324
      %v328 = vpack.c.bf16 %v324, %v324
      %v329 = vpack.c.bf16 %v326, %v326
      %v330 = vld [vmem:[%s293] sm:$0xff]
      %v331 = vld [vmem:[%s293 + $0x8] sm:$0xff]
      %v332 = vld [vmem:[%s293 + $0x10] sm:$0xff]
      %v333 = vld [vmem:[%s293 + $0x18] sm:$0xff]
      %v334 = vpack.c.bf16 %v331, %v330
      %v335 = vpack.c.bf16 %v333, %v332
      %vm336 = vcmask 31744
      %v338 = vsel %vm336, %v334, 0
      %v341 = vsel %vm336, %v335, 0
      %vm343 = vcmask 1041408
      %v345 = vsel %vm343, %v328, 0
      %v348 = vsel %vm343, %v329, 0
      %350 = vmatprep.subr.bf16.mxu0 %v348
      %351 = vmatpush1.bf16.msra.mxu0 %v345
      %352 = vmatprep.subr.bf16.mxu0 0
      %353 = vmatpush1.bf16.msra.mxu0 0
      %354 = vmatprep.subr.bf16.mxu0 0
      %355 = vmatpush1.bf16.msra.mxu0 0
      %356 = vmatprep.subr.bf16.mxu0 0
      %357 = vmatpush1.bf16.msra.mxu0 0
      %358 = vmatprep.subr.bf16.mxu0 0
      %359 = vmatpush1.bf16.msra.mxu0 0
      %360 = vmatprep.subr.bf16.mxu0 0
      %361 = vmatpush1.bf16.msra.mxu0 0
      %362 = vmatprep.subr.bf16.mxu0 0
      %363 = vmatpush1.bf16.msra.mxu0 0
      %364 = vmatprep.subr.bf16.mxu0 0
      %365 = vmatpush1.bf16.msra.mxu0 0
      %366 = vmatprep.subr.bf16.mxu0 0
      %367 = vmatpush1.bf16.msra.mxu0 0
      %368 = vmatprep.subr.bf16.mxu0 0
      %369 = vmatpush1.bf16.msra.mxu0 0
      %370 = vmatprep.subr.bf16.mxu0 0
      %371 = vmatpush1.bf16.msra.mxu0 0
      %372 = vmatprep.subr.bf16.mxu0 0
      %373 = vmatpush1.bf16.msra.mxu0 0
      %374 = vmatprep.subr.bf16.mxu0 0
      %375 = vmatpush1.bf16.msra.mxu0 0
      %376 = vmatprep.subr.bf16.mxu0 0
      %377 = vmatpush1.bf16.msra.mxu0 0
      %378 = vmatprep.subr.bf16.mxu0 0
      %379 = vmatpush1.bf16.msra.mxu0 0
      %380 = vmatprep.subr.bf16.mxu0 0
      %381 = vmatpush1.bf16.msra.mxu0 0
      %382 = vmatprep.mubr.bf16.mxu0 0
      %383 = vmatmul.mubr.bf16.gmra.mrb[0].mxu0 %v338
      %v384 = vpop.f32.mrb[0].mxu0
      %v385 = vadd.f32 0.0, %v384
      %v386 = vpop.f32.mrb[0].mxu0
      %v387 = vadd.f32 0.0, %v386
      %v388 = vpop.f32.mrb[0].mxu0
      %v389 = vadd.f32 0.0, %v388
      %v390 = vpop.f32.mrb[0].mxu0
      %v391 = vadd.f32 0.0, %v390
      %392 = vmatprep.mubr.bf16.mxu0 0
      %393 = vmatmul.mubr.bf16.gmra.mrb[0].mxu0 %v341
      %v394 = vpop.f32.mrb[0].mxu0
      %v395 = vadd.f32 0.0, %v394
      %v396 = vpop.f32.mrb[0].mxu0
      %v397 = vadd.f32 0.0, %v396
      %v398 = vpop.f32.mrb[0].mxu0
      %v399 = vadd.f32 0.0, %v398
      %v400 = vpop.f32.mrb[0].mxu0
      %v401 = vadd.f32 0.0, %v400
      %402 = vdwg.mxu0
      %v403 = vld [vmem:[%s299] sm:$0xff]
      %v404 = vld [vmem:[%s299 + $0x8] sm:$0xff]
      %v405 = vld [vmem:[%s299 + $0x10] sm:$0xff]
      %v406 = vld [vmem:[%s299 + $0x18] sm:$0xff]
      %408 = vset.pattern.permute.xlu0 0
      %409 = vperm.xlu0 %408, %v403
      %v410 = vpop.permute.xlu0 %409
      %413 = vset.pattern.permute.xlu0 0
      %414 = vperm.xlu0 %413, %v404
      %v415 = vpop.permute.xlu0 %414
      %418 = vset.pattern.permute.xlu0 0
      %419 = vperm.xlu0 %418, %v405
      %v420 = vpop.permute.xlu0 %419
      %423 = vset.pattern.permute.xlu0 0
      %424 = vperm.xlu0 %423, %v406
      %v425 = vpop.permute.xlu0 %424
      %v427 = vmul.f32 %v385, %v410
      %v428 = vmul.f32 %v387, %v410
      %v429 = vmul.f32 %v389, %v415
      %v430 = vmul.f32 %v391, %v415
      %v431 = vmul.f32 %v395, %v420
      %v432 = vmul.f32 %v397, %v420
      %v433 = vmul.f32 %v399, %v425
      %v434 = vmul.f32 %v401, %v425
      %v435 = vld [vmem:[%s305] sm:$0xff]
      %v436 = vld [vmem:[%s305 + $0x8] sm:$0xff]
      %v437 = vld [vmem:[%s305 + $0x10] sm:$0xff]
      %v438 = vld [vmem:[%s305 + $0x18] sm:$0xff]
      %440 = vset.pattern.permute.xlu0 0
      %441 = vperm.xlu0 %440, %v435
      %v442 = vpop.permute.xlu0 %441
      %445 = vset.pattern.permute.xlu0 0
      %446 = vperm.xlu0 %445, %v436
      %v447 = vpop.permute.xlu0 %446
      %450 = vset.pattern.permute.xlu0 0
      %451 = vperm.xlu0 %450, %v437
      %v452 = vpop.permute.xlu0 %451
      %455 = vset.pattern.permute.xlu0 0
      %456 = vperm.xlu0 %455, %v438
      %v457 = vpop.permute.xlu0 %456
      %v459 = vadd.f32 %v427, %v442
      %v460 = vadd.f32 %v428, %v442
      %v461 = vadd.f32 %v429, %v447
      %v462 = vadd.f32 %v430, %v447
      %v463 = vadd.f32 %v431, %v452
      %v464 = vadd.f32 %v432, %v452
      %v465 = vadd.f32 %v433, %v457
      %v466 = vadd.f32 %v434, %v457
      %v467 = vmax.f32 %v459, 0.0
      %v468 = vmax.f32 %v460, 0.0
      %v469 = vmax.f32 %v461, 0.0
      %v470 = vmax.f32 %v462, 0.0
      %v471 = vmax.f32 %v463, 0.0
      %v472 = vmax.f32 %v464, 0.0
      %v473 = vmax.f32 %v465, 0.0
      %v474 = vmax.f32 %v466, 0.0
      %475 = vst [vmem:[%s320] sm:$0xff] %v467
      %476 = vst [vmem:[%s320 + $0x8] sm:$0xff] %v468
      %477 = vst [vmem:[%s320 + $0x10] sm:$0xff] %v469
      %478 = vst [vmem:[%s320 + $0x18] sm:$0xff] %v470
      %479 = vst [vmem:[%s320 + $0x20] sm:$0xff] %v471
      %480 = vst [vmem:[%s320 + $0x28] sm:$0xff] %v472
      %481 = vst [vmem:[%s320 + $0x30] sm:$0xff] %v473
      %482 = vst [vmem:[%s320 + $0x38] sm:$0xff] %v474
      %s483 = smul.u32 4, %s21
      %s484 = smul.u32 2, %s22
      %p485 = scmp.lt.s32.totalorder %s20, 1
      %s486 = scalar_select %p485, %s20, 1
      %p487 = scmp.lt.s32.totalorder %s483, 3
      %s488 = scalar_select %p487, %s483, 3
      %p489 = scmp.lt.s32.totalorder %s484, 1
      %s490 = scalar_select %p489, %s484, 1
      %s491 = smul.addr %s488, 2
      %s492 = sadd.s32 %s490, %s491
      %s493 = smul.addr %s486, 8
      %s494 = sadd.s32 %s492, %s493
      %s495 = smul.addr %s494, 8
      %s496 = scalar_lea.vmem %s4, %s495
      // Predicated region
      $region37: #{conv1x1_bn_relu.1} parent=35 // pred_check
        %p497 = pneg %p162
      $region38: #{conv1x1_bn_relu.1} parent=35 // pred_check_branch
        %499 = sbr.rel (%p497) target = $region40
      $region39: #{conv1x1_bn_relu.1} parent=35 // pred_region
        %s500 = smul.u32 4, %s21
        %s501 = smul.u32 2, %s22
      $region40: #{conv1x1_bn_relu.1} parent=35 // pred_fallthru
        _
    $region36: #{conv1x1_bn_relu.1} parent=5 // pred_fallthru
      _
    %p502 = scmp.le.s32.totalorder 2, %s10
    // Predicated region
    $region41: #{conv1x1_bn_relu.1} parent=5 // pred_check
      %p503 = pneg %p502
    $region42: #{conv1x1_bn_relu.1} parent=5 // pred_check_branch
      %505 = sbr.rel (%p503) target = $region44
    $region43: #{conv1x1_bn_relu.1} parent=5 // pred_region
      %s506 = ssub.s32 %s10, 2
      // Predicated region
      $region45: #{conv1x1_bn_relu.1} parent=43 // pred_check
        %p507 = pneg %p168
      $region46: #{conv1x1_bn_relu.1} parent=43 // pred_check_branch
        %509 = sbr.rel (%p507) target = $region48
      $region47: #{conv1x1_bn_relu.1} parent=43 // pred_region
        %s510 = smul.u32 4, %s24
        %s511 = smul.u32 2, %s25
        %p512 = scmp.lt.s32.totalorder %s23, 1
        %s513 = scalar_select %p512, %s23, 1
        %p514 = scmp.lt.s32.totalorder %s510, 3
        %s515 = scalar_select %p514, %s510, 3
        %p516 = scmp.lt.s32.totalorder %s511, 1
        %s517 = scalar_select %p516, %s511, 1
        %s518 = smul.addr %s515, 2
        %s519 = sadd.s32 %s517, %s518
        %s520 = smul.addr %s513, 8
        %s521 = sadd.s32 %s519, %s520
        %s522 = smul.addr %s521, 8
        %s523 = scalar_lea.vmem %s4, %s522
      $region48: #{conv1x1_bn_relu.1} parent=43 // pred_fallthru
        _
    $region44: #{conv1x1_bn_relu.1} parent=5 // pred_fallthru
      _
  $region6: #{conv1x1_bn_relu.1} parent=0 // loop_footer
    %s14 = sadd.s32 1, %s10
  $region7: #{conv1x1_bn_relu.1} parent=0 // loop_footer_branch
    %9 = sbr.rel target = $region3
  $region8: #{conv1x1_bn_relu.1} parent=0 // loop_exit
    _

</llo_original>
